<compile_context>
chip_gen: v7x
topology: tpu7x:2x2x1
jax: 0.10.0
libtpu: 0.0.40
codegen_flags: <defaults>
</compile_context>

<pallas_src>
import functools

import jax
import jax.numpy as jnp
from jax.experimental import pallas as pl
from jax.experimental.pallas import tpu as pltpu

LAYER_SIZES = [2, 128, 128, 128, 128, 2]
MAX_BATCH_TILE = 2048   # rows per grid step; sweep 1024-4096 (VMEM use is only a few MiB)
W5_PAD = 128            # final matmul kept 128-wide in VMEM (MXU-friendly); HBM output is 2-wide


def _round_up(n, m):
    return ((n + m - 1) // m) * m


def _softplus(x):
    # Numerically stable Softplus (beta=1), matches torch.nn.Softplus default.
    # Runs on the EUP; the dtype of `x` decides f32 vs bf16 transcendentals.
    return jnp.maximum(x, 0) + jnp.log1p(jnp.exp(-jnp.abs(x)))


def _mlp_kernel(x_ref,
                w1_ref, b1_ref,
                w2_ref, b2_ref,
                w3_ref, b3_ref,
                w4_ref, b4_ref,
                w5_ref, b5_ref,
                o_ref,
                *, act_dtype):
    """Fused 5-layer MLP over one batch tile. All weights resident in VMEM."""
    x = x_ref[...]  # (T, 2) f32

    # Layer 1 (K = 2): skip the MXU entirely, two broadcast-FMAs on the VPU.
    h = (x[:, 0:1] * w1_ref[0:1, :]
         + x[:, 1:2] * w1_ref[1:2, :]
         + b1_ref[...])
    # Softplus in act_dtype (bf16 on v6e/v7x -> half the EUP time, and it already
    # produces the bf16 operand the next MXU matmul wants; f32 on v5e/older).
    h = _softplus(h.astype(act_dtype))

    def dense(h, w_ref, b_ref):
        # bf16 MXU operands, f32 accumulation, f32 bias add.
        return jnp.dot(h.astype(jnp.bfloat16), w_ref[...],
                       preferred_element_type=jnp.float32) + b_ref[...]

    # Layers 2-4: MXU matmul + softplus.
    h = _softplus(dense(h, w2_ref, b2_ref).astype(act_dtype))
    h = _softplus(dense(h, w3_ref, b3_ref).astype(act_dtype))
    h = _softplus(dense(h, w4_ref, b4_ref).astype(act_dtype))

    # Layer 5: 128-wide matmul in VMEM, but only the 2 real columns go to HBM
    # (narrow output -> ~64x less HBM writeback than a 128-lane padded output).
    out = dense(h, w5_ref, b5_ref)
    o_ref[...] = out[:, :LAYER_SIZES[-1]].astype(o_ref.dtype)


def prepare_params(params):
    """Convert f32 (W(in,out), b(1,out)) pairs into the kernel's storage formats."""
    (w1, b1), (w2, b2), (w3, b3), (w4, b4), (w5, b5) = params
    # Pad the final layer to W5_PAD output lanes inside VMEM only (zeros -> padded
    # columns are exactly 0 and are never written to HBM).
    w5p = jnp.zeros((w5.shape[0], W5_PAD), jnp.float32).at[:, :w5.shape[1]].set(w5)
    b5p = jnp.zeros((1, W5_PAD), jnp.float32).at[:, :b5.shape[1]].set(b5)
    return (
        w1.astype(jnp.float32), b1.astype(jnp.float32),   # layer 1 stays f32 (VPU path)
        w2.astype(jnp.bfloat16), b2.astype(jnp.float32),
        w3.astype(jnp.bfloat16), b3.astype(jnp.float32),
        w4.astype(jnp.bfloat16), b4.astype(jnp.float32),
        w5p.astype(jnp.bfloat16), b5p.astype(jnp.float32),
    )


@functools.partial(jax.jit, static_argnames=("batch_tile", "use_bf16_act"))
def _forward_padded(x_pad, flat_params, *, batch_tile, use_bf16_act):
    n_pad, in_f = x_pad.shape
    out_f = LAYER_SIZES[-1]
    grid = (n_pad // batch_tile,)

    in_specs = [pl.BlockSpec((batch_tile, in_f), lambda i: (i, 0))]
    for p in flat_params:
        # block_shape == full array shape -> exempt from the (8,128) rule.
        # Grid-invariant index_map: the pipeline only re-copies a block when its
        # index changes, so the ~130 KB of weights stay resident across steps.
        in_specs.append(pl.BlockSpec(p.shape, lambda i: (0, 0)))

    # Cost estimate: 4 dense 128x128 matmuls + tiny first layer; 2 EUP
    # transcendentals per softplus element (the true compute bottleneck).
    per_row_flops = 2 * 2 * 128 + 3 * (2 * 128 * 128) + 2 * 128 * W5_PAD
    flops = n_pad * per_row_flops
    transcendentals = n_pad * 4 * 128 * 2
    bytes_accessed = (n_pad * (in_f + out_f) * 4
                      + sum(int(p.size) * p.dtype.itemsize for p in flat_params))

    kernel = functools.partial(
        _mlp_kernel,
        act_dtype=jnp.bfloat16 if use_bf16_act else jnp.float32)

    return pl.pallas_call(
        kernel,
        out_shape=jax.ShapeDtypeStruct((n_pad, out_f), jnp.float32),
        grid_spec=pltpu.PrefetchScalarGridSpec(
            num_scalar_prefetch=0,
            grid=grid,
            in_specs=in_specs,
            out_specs=pl.BlockSpec((batch_tile, out_f), lambda i: (i, 0)),
        ),
        compiler_params=pltpu.CompilerParams(
            dimension_semantics=("parallel",)),
        cost_estimate=pl.CostEstimate(
            flops=flops,
            transcendentals=transcendentals,
            bytes_accessed=bytes_accessed),
    )(x_pad, *flat_params)


def _use_bf16_activations():
    # bf16 VPU/EUP exists on v6e / v7x; keep f32 softplus on v5e and older.
    kind = jax.devices()[0].device_kind.lower()
    return ("v6" in kind) or ("v7" in kind)


def _choose_tile(n):
    n8 = _round_up(max(n, 1), 8)
    # Aim for >= 2 grid steps whenever the batch allows it so both v7x
    # TensorCores get work; cap the tile so per-step overhead stays small.
    half = _round_up(-(-n8 // 2), 8)
    return max(8, min(MAX_BATCH_TILE, half))


def inter_map_forward(x, flat_params):
    """x: (N, 2) float32. Pads N internally; returns (N, 2) float32."""
    n = x.shape[0]
    tile = _choose_tile(n)
    n_pad = _round_up(n, tile)
    if n_pad != n:
        x = jnp.pad(x, ((0, n_pad - n), (0, 0)))
    out = _forward_padded(x, flat_params, batch_tile=tile,
                          use_bf16_act=_use_bf16_activations())
    return out[:n]


def init_params(key):
    """Deterministic synthetic init (Xavier-uniform-ish)."""
    # TODO(synk): torch-side get_init_fun()/create_sequential_metalinear_layer are not
    # available; a deterministic Xavier-uniform stand-in is used for the weights.
    params = []
    for fin, fout in zip(LAYER_SIZES[:-1], LAYER_SIZES[1:]):
        key, wk = jax.random.split(key)
        limit = jnp.sqrt(6.0 / (fin + fout))
        w = jax.random.uniform(wk, (fin, fout), jnp.float32, -limit, limit)
        b = jnp.zeros((1, fout), jnp.float32)
        params.append((w, b))
    return params


def reference_forward(x, params):
    """Pure f32 reference matching the torch module's forward."""
    h = x
    n_layers = len(params)
    for i, (w, b) in enumerate(params):
        h = h @ w + b
        if i < n_layers - 1:
            h = jax.nn.softplus(h)
    return h


if __name__ == "__main__":
    key = jax.random.PRNGKey(0)
    key, xk = jax.random.split(key)

    batch = 16  # small test batch
    x = jax.random.normal(xk, (batch, LAYER_SIZES[0]), jnp.float32)

    params = init_params(jax.random.PRNGKey(0))
    flat_params = prepare_params(params)

    out = inter_map_forward(x, flat_params)
    out = jax.block_until_ready(out)

    ref = reference_forward(x, params)
    assert out.shape == (batch, LAYER_SIZES[-1])
    # bf16 MXU operands (and bf16 softplus on v6e/v7x) -> loose tolerance vs f32 ref.
    assert jnp.allclose(out, ref, atol=5e-2, rtol=5e-2), (
        f"max abs err {jnp.max(jnp.abs(out - ref))}")

    print("KERNEL_OK")
</pallas_src>

<mosaic_0001>
module attributes {stable_mosaic.version = 11 : i64} {
  func.func @_mlp_kernel(%arg0: i32, %arg1: memref<8x2xf32, #tpu.memory_space<vmem>>, %arg2: memref<2x128xf32, #tpu.memory_space<vmem>>, %arg3: memref<1x128xf32, #tpu.memory_space<vmem>>, %arg4: memref<128x128xbf16, #tpu.memory_space<vmem>>, %arg5: memref<1x128xf32, #tpu.memory_space<vmem>>, %arg6: memref<128x128xbf16, #tpu.memory_space<vmem>>, %arg7: memref<1x128xf32, #tpu.memory_space<vmem>>, %arg8: memref<128x128xbf16, #tpu.memory_space<vmem>>, %arg9: memref<1x128xf32, #tpu.memory_space<vmem>>, %arg10: memref<128x128xbf16, #tpu.memory_space<vmem>>, %arg11: memref<1x128xf32, #tpu.memory_space<vmem>>, %arg12: memref<8x2xf32, #tpu.memory_space<vmem>>) attributes {dimension_semantics = [#tpu.dimension_semantics<parallel>], iteration_bounds = array<i64: 2>, scalar_prefetch = 0 : i64, scratch_operands = 0 : i64, tpu.core_type = #tpu.core_type<tc>, window_params = [{transform_indices = @transform_0, window_bounds = array<i64: 8, 2>}, {pipeline_mode = #tpu.pipeline_mode<synchronous>, transform_indices = @transform_1, window_bounds = array<i64: 2, 128>}, {pipeline_mode = #tpu.pipeline_mode<synchronous>, transform_indices = @transform_2, window_bounds = array<i64: 1, 128>}, {pipeline_mode = #tpu.pipeline_mode<synchronous>, transform_indices = @transform_3, window_bounds = array<i64: 128, 128>}, {pipeline_mode = #tpu.pipeline_mode<synchronous>, transform_indices = @transform_4, window_bounds = array<i64: 1, 128>}, {pipeline_mode = #tpu.pipeline_mode<synchronous>, transform_indices = @transform_5, window_bounds = array<i64: 128, 128>}, {pipeline_mode = #tpu.pipeline_mode<synchronous>, transform_indices = @transform_6, window_bounds = array<i64: 1, 128>}, {pipeline_mode = #tpu.pipeline_mode<synchronous>, transform_indices = @transform_7, window_bounds = array<i64: 128, 128>}, {pipeline_mode = #tpu.pipeline_mode<synchronous>, transform_indices = @transform_8, window_bounds = array<i64: 1, 128>}, {pipeline_mode = #tpu.pipeline_mode<synchronous>, transform_indices = @transform_9, window_bounds = array<i64: 128, 128>}, {pipeline_mode = #tpu.pipeline_mode<synchronous>, transform_indices = @transform_10, window_bounds = array<i64: 1, 128>}, {transform_indices = @transform_11, window_bounds = array<i64: 8, 2>}]} {
    %c0 = arith.constant 0 : index
    %c0_0 = arith.constant 0 : index
    %0 = vector.load %arg1[%c0, %c0_0] : memref<8x2xf32, #tpu.memory_space<vmem>>, vector<8x2xf32>
    %1 = vector.extract_strided_slice %0 {offsets = [0, 0], sizes = [8, 1], strides = [1, 1]} : vector<8x2xf32> to vector<8x1xf32>
    %c0_1 = arith.constant 0 : index
    %c0_2 = arith.constant 0 : index
    %2 = vector.load %arg2[%c0_1, %c0_2] : memref<2x128xf32, #tpu.memory_space<vmem>>, vector<1x128xf32>
    %3 = vector.broadcast %1 : vector<8x1xf32> to vector<8x128xf32>
    %4 = vector.broadcast %2 : vector<1x128xf32> to vector<8x128xf32>
    %5 = arith.mulf %3, %4 : vector<8x128xf32>
    %6 = vector.extract_strided_slice %0 {offsets = [0, 1], sizes = [8, 1], strides = [1, 1]} : vector<8x2xf32> to vector<8x1xf32>
    %c1 = arith.constant 1 : index
    %c0_3 = arith.constant 0 : index
    %7 = vector.load %arg2[%c1, %c0_3] : memref<2x128xf32, #tpu.memory_space<vmem>>, vector<1x128xf32>
    %8 = vector.broadcast %6 : vector<8x1xf32> to vector<8x128xf32>
    %9 = vector.broadcast %7 : vector<1x128xf32> to vector<8x128xf32>
    %10 = arith.mulf %8, %9 : vector<8x128xf32>
    %11 = arith.addf %5, %10 : vector<8x128xf32>
    %c0_4 = arith.constant 0 : index
    %c0_5 = arith.constant 0 : index
    %12 = vector.load %arg3[%c0_4, %c0_5] : memref<1x128xf32, #tpu.memory_space<vmem>>, vector<1x128xf32>
    %13 = vector.broadcast %12 : vector<1x128xf32> to vector<8x128xf32>
    %14 = arith.addf %11, %13 : vector<8x128xf32>
    %cst = arith.constant 0.000000e+00 : f32
    %15 = vector.broadcast %cst : f32 to vector<8x128xf32>
    %16 = arith.maximumf %14, %15 : vector<8x128xf32>
    %17 = math.absf %14 : vector<8x128xf32>
    %cst_6 = arith.constant 0.000000e+00 : f32
    %18 = vector.broadcast %cst_6 : f32 to vector<8x128xf32>
    %19 = arith.subf %18, %17 : vector<8x128xf32>
    %20 = math.exp %19 : vector<8x128xf32>
    %21 = math.log1p %20 : vector<8x128xf32>
    %22 = arith.addf %16, %21 : vector<8x128xf32>
    %23 = arith.truncf %22 : vector<8x128xf32> to vector<8x128xbf16>
    %c0_7 = arith.constant 0 : index
    %c0_8 = arith.constant 0 : index
    %24 = vector.load %arg4[%c0_7, %c0_8] : memref<128x128xbf16, #tpu.memory_space<vmem>>, vector<128x128xbf16>
    %cst_9 = arith.constant dense<0.000000e+00> : vector<8x128xf32>
    %25 = tpu.matmul %23, %24, %cst_9 {dimension_numbers = #tpu.dot_dimension_numbers<[1], [0], [0], [1], [0, 0, 1, 1], [], []>} : vector<8x128xbf16>, vector<128x128xbf16>, vector<8x128xf32> -> vector<8x128xf32>
    %c0_10 = arith.constant 0 : index
    %c0_11 = arith.constant 0 : index
    %26 = vector.load %arg5[%c0_10, %c0_11] : memref<1x128xf32, #tpu.memory_space<vmem>>, vector<1x128xf32>
    %27 = vector.broadcast %26 : vector<1x128xf32> to vector<8x128xf32>
    %28 = arith.addf %25, %27 : vector<8x128xf32>
    %cst_12 = arith.constant 0.000000e+00 : f32
    %29 = vector.broadcast %cst_12 : f32 to vector<8x128xf32>
    %30 = arith.maximumf %28, %29 : vector<8x128xf32>
    %31 = math.absf %28 : vector<8x128xf32>
    %cst_13 = arith.constant 0.000000e+00 : f32
    %32 = vector.broadcast %cst_13 : f32 to vector<8x128xf32>
    %33 = arith.subf %32, %31 : vector<8x128xf32>
    %34 = math.exp %33 : vector<8x128xf32>
    %35 = math.log1p %34 : vector<8x128xf32>
    %36 = arith.addf %30, %35 : vector<8x128xf32>
    %37 = arith.truncf %36 : vector<8x128xf32> to vector<8x128xbf16>
    %c0_14 = arith.constant 0 : index
    %c0_15 = arith.constant 0 : index
    %38 = vector.load %arg6[%c0_14, %c0_15] : memref<128x128xbf16, #tpu.memory_space<vmem>>, vector<128x128xbf16>
    %cst_16 = arith.constant dense<0.000000e+00> : vector<8x128xf32>
    %39 = tpu.matmul %37, %38, %cst_16 {dimension_numbers = #tpu.dot_dimension_numbers<[1], [0], [0], [1], [0, 0, 1, 1], [], []>} : vector<8x128xbf16>, vector<128x128xbf16>, vector<8x128xf32> -> vector<8x128xf32>
    %c0_17 = arith.constant 0 : index
    %c0_18 = arith.constant 0 : index
    %40 = vector.load %arg7[%c0_17, %c0_18] : memref<1x128xf32, #tpu.memory_space<vmem>>, vector<1x128xf32>
    %41 = vector.broadcast %40 : vector<1x128xf32> to vector<8x128xf32>
    %42 = arith.addf %39, %41 : vector<8x128xf32>
    %cst_19 = arith.constant 0.000000e+00 : f32
    %43 = vector.broadcast %cst_19 : f32 to vector<8x128xf32>
    %44 = arith.maximumf %42, %43 : vector<8x128xf32>
    %45 = math.absf %42 : vector<8x128xf32>
    %cst_20 = arith.constant 0.000000e+00 : f32
    %46 = vector.broadcast %cst_20 : f32 to vector<8x128xf32>
    %47 = arith.subf %46, %45 : vector<8x128xf32>
    %48 = math.exp %47 : vector<8x128xf32>
    %49 = math.log1p %48 : vector<8x128xf32>
    %50 = arith.addf %44, %49 : vector<8x128xf32>
    %51 = arith.truncf %50 : vector<8x128xf32> to vector<8x128xbf16>
    %c0_21 = arith.constant 0 : index
    %c0_22 = arith.constant 0 : index
    %52 = vector.load %arg8[%c0_21, %c0_22] : memref<128x128xbf16, #tpu.memory_space<vmem>>, vector<128x128xbf16>
    %cst_23 = arith.constant dense<0.000000e+00> : vector<8x128xf32>
    %53 = tpu.matmul %51, %52, %cst_23 {dimension_numbers = #tpu.dot_dimension_numbers<[1], [0], [0], [1], [0, 0, 1, 1], [], []>} : vector<8x128xbf16>, vector<128x128xbf16>, vector<8x128xf32> -> vector<8x128xf32>
    %c0_24 = arith.constant 0 : index
    %c0_25 = arith.constant 0 : index
    %54 = vector.load %arg9[%c0_24, %c0_25] : memref<1x128xf32, #tpu.memory_space<vmem>>, vector<1x128xf32>
    %55 = vector.broadcast %54 : vector<1x128xf32> to vector<8x128xf32>
    %56 = arith.addf %53, %55 : vector<8x128xf32>
    %cst_26 = arith.constant 0.000000e+00 : f32
    %57 = vector.broadcast %cst_26 : f32 to vector<8x128xf32>
    %58 = arith.maximumf %56, %57 : vector<8x128xf32>
    %59 = math.absf %56 : vector<8x128xf32>
    %cst_27 = arith.constant 0.000000e+00 : f32
    %60 = vector.broadcast %cst_27 : f32 to vector<8x128xf32>
    %61 = arith.subf %60, %59 : vector<8x128xf32>
    %62 = math.exp %61 : vector<8x128xf32>
    %63 = math.log1p %62 : vector<8x128xf32>
    %64 = arith.addf %58, %63 : vector<8x128xf32>
    %65 = arith.truncf %64 : vector<8x128xf32> to vector<8x128xbf16>
    %c0_28 = arith.constant 0 : index
    %c0_29 = arith.constant 0 : index
    %66 = vector.load %arg10[%c0_28, %c0_29] : memref<128x128xbf16, #tpu.memory_space<vmem>>, vector<128x128xbf16>
    %cst_30 = arith.constant dense<0.000000e+00> : vector<8x128xf32>
    %67 = tpu.matmul %65, %66, %cst_30 {dimension_numbers = #tpu.dot_dimension_numbers<[1], [0], [0], [1], [0, 0, 1, 1], [], []>} : vector<8x128xbf16>, vector<128x128xbf16>, vector<8x128xf32> -> vector<8x128xf32>
    %c0_31 = arith.constant 0 : index
    %c0_32 = arith.constant 0 : index
    %68 = vector.load %arg11[%c0_31, %c0_32] : memref<1x128xf32, #tpu.memory_space<vmem>>, vector<1x128xf32>
    %69 = vector.broadcast %68 : vector<1x128xf32> to vector<8x128xf32>
    %70 = arith.addf %67, %69 : vector<8x128xf32>
    %71 = vector.extract_strided_slice %70 {offsets = [0, 0], sizes = [8, 2], strides = [1, 1]} : vector<8x128xf32> to vector<8x2xf32>
    %c0_33 = arith.constant 0 : index
    %c0_34 = arith.constant 0 : index
    %72 = vector.load %arg12[%c0_33, %c0_34] : memref<8x2xf32, #tpu.memory_space<vmem>>, vector<8x2xf32>
    tpu.vector_store %arg12[%c0_33, %c0_34], %71 {strides = array<i32>} : memref<8x2xf32, #tpu.memory_space<vmem>>, vector<8x2xf32>,
    return
  }
  func.func @transform_0(%arg0: i32) -> (i32, i32) {
    %c0_i32 = arith.constant 0 : i32
    %c0_i32_0 = arith.constant 0 : i32
    return %arg0, %c0_i32 : i32, i32
  }
  func.func @transform_1(%arg0: i32) -> (i32, i32) {
    %c0_i32 = arith.constant 0 : i32
    %c0_i32_0 = arith.constant 0 : i32
    %c0_i32_1 = arith.constant 0 : i32
    return %c0_i32, %c0_i32_0 : i32, i32
  }
  func.func @transform_2(%arg0: i32) -> (i32, i32) {
    %c0_i32 = arith.constant 0 : i32
    %c0_i32_0 = arith.constant 0 : i32
    %c0_i32_1 = arith.constant 0 : i32
    return %c0_i32, %c0_i32_0 : i32, i32
  }
  func.func @transform_3(%arg0: i32) -> (i32, i32) {
    %c0_i32 = arith.constant 0 : i32
    %c0_i32_0 = arith.constant 0 : i32
    %c0_i32_1 = arith.constant 0 : i32
    return %c0_i32, %c0_i32_0 : i32, i32
  }
  func.func @transform_4(%arg0: i32) -> (i32, i32) {
    %c0_i32 = arith.constant 0 : i32
    %c0_i32_0 = arith.constant 0 : i32
    %c0_i32_1 = arith.constant 0 : i32
    return %c0_i32, %c0_i32_0 : i32, i32
  }
  func.func @transform_5(%arg0: i32) -> (i32, i32) {
    %c0_i32 = arith.constant 0 : i32
    %c0_i32_0 = arith.constant 0 : i32
    %c0_i32_1 = arith.constant 0 : i32
    return %c0_i32, %c0_i32_0 : i32, i32
  }
  func.func @transform_6(%arg0: i32) -> (i32, i32) {
    %c0_i32 = arith.constant 0 : i32
    %c0_i32_0 = arith.constant 0 : i32
    %c0_i32_1 = arith.constant 0 : i32
    return %c0_i32, %c0_i32_0 : i32, i32
  }
  func.func @transform_7(%arg0: i32) -> (i32, i32) {
    %c0_i32 = arith.constant 0 : i32
    %c0_i32_0 = arith.constant 0 : i32
    %c0_i32_1 = arith.constant 0 : i32
    return %c0_i32, %c0_i32_0 : i32, i32
  }
  func.func @transform_8(%arg0: i32) -> (i32, i32) {
    %c0_i32 = arith.constant 0 : i32
    %c0_i32_0 = arith.constant 0 : i32
    %c0_i32_1 = arith.constant 0 : i32
    return %c0_i32, %c0_i32_0 : i32, i32
  }
  func.func @transform_9(%arg0: i32) -> (i32, i32) {
    %c0_i32 = arith.constant 0 : i32
    %c0_i32_0 = arith.constant 0 : i32
    %c0_i32_1 = arith.constant 0 : i32
    return %c0_i32, %c0_i32_0 : i32, i32
  }
  func.func @transform_10(%arg0: i32) -> (i32, i32) {
    %c0_i32 = arith.constant 0 : i32
    %c0_i32_0 = arith.constant 0 : i32
    %c0_i32_1 = arith.constant 0 : i32
    return %c0_i32, %c0_i32_0 : i32, i32
  }
  func.func @transform_11(%arg0: i32) -> (i32, i32) {
    %c0_i32 = arith.constant 0 : i32
    %c0_i32_0 = arith.constant 0 : i32
    return %arg0, %c0_i32 : i32, i32
  }
}

</mosaic_0001>

<llo_original>
// kernel: _forward_padded.1
$region0: #{_forward_padded.1}
  #allocation0 [shape = 'u32[]', space=smem, size = 0x4, offset = 0x4, fixed_abs, tag = 'smem constant byte address 0x4 - core index']
  #allocation1 [shape = 'u32[144,128]{1,0:T(1,128)}', space=vmem, size = 0x12000, scoped, tag = 'internal scratch']
  %s0 = inlined_call_operand.vmem [shape: f32[16,2], index: 0, kind: input, shape index: {}]
  %s1 = inlined_call_operand.vmem [shape: f32[2,128], index: 1, kind: input, shape index: {}]
  %s2 = inlined_call_operand.vmem [shape: f32[1,128], index: 2, kind: input, shape index: {}]
  %s3 = inlined_call_operand.hbm [shape: bf16[128,128], index: 3, kind: input, shape index: {}]
  %s4 = inlined_call_operand.vmem [shape: f32[1,128], index: 4, kind: input, shape index: {}]
  %s5 = inlined_call_operand.hbm [shape: bf16[128,128], index: 5, kind: input, shape index: {}]
  %s6 = inlined_call_operand.vmem [shape: f32[1,128], index: 6, kind: input, shape index: {}]
  %s7 = inlined_call_operand.hbm [shape: bf16[128,128], index: 7, kind: input, shape index: {}]
  %s8 = inlined_call_operand.vmem [shape: f32[1,128], index: 8, kind: input, shape index: {}]
  %s9 = inlined_call_operand.hbm [shape: bf16[128,128], index: 9, kind: input, shape index: {}]
  %s10 = inlined_call_operand.vmem [shape: f32[1,128], index: 10, kind: input, shape index: {}]
  %s11 = inlined_call_operand.vmem [shape: f32[16,2], index: 11, kind: output, shape index: {}]
  %s12 = sld [smem:[#allocation0]]
  $region93: #{_forward_padded.1} parent=0
    _
  %s14 = ssub.s32 1, %s12
  %s15 = scalar_select 0, %s14, %s12
  $region1: #{_forward_padded.1} parent=0
    #allocation2 [shape = 'u8[32768]{0}', space=vmem, size = 0x8000, scoped, tag = 'input window, operand 3, single buffered']
    #allocation3 [shape = 's32[2]{0}', space=sflag, size = 0x8, scoped, tag = 'scoped memory for _forward_padded.1']
    #allocation4 [shape = 'u8[32768]{0}', space=vmem, size = 0x8000, scoped, tag = 'input window, operand 5, single buffered']
    #allocation5 [shape = 's32[1]{0}', space=sflag, size = 0x4, scoped, tag = 'scoped memory for _forward_padded.1']
    #allocation6 [shape = 'u8[32768]{0}', space=vmem, size = 0x8000, scoped, tag = 'input window, operand 7, single buffered']
    #allocation7 [shape = 'u8[32768]{0}', space=vmem, size = 0x8000, scoped, tag = 'input window, operand 9, single buffered']
    #allocation8 [shape = 's32[1]{0}', space=sflag, size = 0x4, scoped, tag = 'scoped memory for _forward_padded.1']
    %16 = vsyncpa [#allocation3], 0
    %17 = vsyncpa [#allocation5], 0
    %18 = vsyncpa [#allocation8], 0
    loop: start=0, step=1, limit=4
    $region2: #{_forward_padded.1} parent=1 // loop_pre_header
      _
    $region3: #{_forward_padded.1} parent=1 // loop_header
      %s20 = sphi 0, %s24
      %p21 = scmp.ge.s32.totalorder %s20, 4
      %s30 = sphi 0, %s32
      %s33 = sphi 0, %s30
      %s34 = sphi 0, %s33
      %s50 = sphi 0, %s34
      %s54 = sphi 0, %s54
      %s56 = sphi 0, %s54
      %s57 = sphi 0, %s56
      %s71 = sphi 0, %s57
      %s75 = sphi 0, %s75
      %s77 = sphi 0, %s75
      %s78 = sphi 0, %s77
      %s92 = sphi 0, %s78
      %s96 = sphi 0, %s96
      %s98 = sphi 0, %s96
      %s99 = sphi 0, %s98
      %s113 = sphi 0, %s99
      %s117 = sphi 0, %s117
      %s119 = sphi 0, %s117
      %s120 = sphi 0, %s119
      %s134 = sphi 0, %s120
      %s138 = sphi 0, %s138
      %s140 = sphi 0, %s138
      %s141 = sphi 0, %s140
      %s155 = sphi 0, %s141
      %s159 = sphi 0, %s159
      %s161 = sphi 0, %s159
      %s162 = sphi 0, %s161
      %s176 = sphi 0, %s162
      %s180 = sphi 0, %s180
      %s182 = sphi 0, %s180
      %s183 = sphi 0, %s182
      %s197 = sphi 0, %s183
      %s201 = sphi 0, %s201
      %s203 = sphi 0, %s201
      %s204 = sphi 0, %s203
      %s218 = sphi 0, %s204
      %s222 = sphi 0, %s222
      %s224 = sphi 0, %s222
      %s225 = sphi 0, %s224
      %s239 = sphi 0, %s225
      %s243 = sphi 0, %s243
      %s245 = sphi 0, %s243
      %s246 = sphi 0, %s245
      %s260 = sphi 0, %s246
      %s266 = sphi 0, %s268
      %s269 = sphi 0, %s266
      %s270 = sphi 0, %s269
      %s286 = sphi 0, %s270
    $region4: #{_forward_padded.1} parent=1 // loop_header_branch
      %23 = sbr.rel (%p21) target = $region8
    $region5: #{_forward_padded.1} parent=1 // loop_body
      %s25 = ssub.s32 %s20, 1
      %s26 = ssub.s32 %s20, 2
      %s27 = sadd.s32 %s20, 1
      %s28 = ssub.s32 %s20, %s27
      %p29 = scmp.eq.s32.totalorder %s28, 0
      %s31 = sadd.s32 %s30, 1
      %s32 = scalar_select %p29, %s30, %s31
      %p35 = pneg %p29
      %p36 = scmp.eq.s32.totalorder %s20, 1
      %p37 = por %p35, %p36
      %p38 = scmp.ne.s32.totalorder %s30, %s33
      %p39 = scmp.eq.s32.totalorder %s20, 0
      %p40 = por %p38, %p39
      %p41 = scmp.ne.s32.totalorder %s30, %s33
      %p42 = scmp.eq.s32.totalorder %s25, 1
      %p43 = por %p41, %p42
      %p44 = scmp.ne.s32.totalorder %s33, %s34
      %p45 = scmp.eq.s32.totalorder %s25, 0
      %p46 = por %p44, %p45
      %p47 = scmp.ne.s32.totalorder %s33, %s34
      %p48 = scmp.eq.s32.totalorder %s26, 1
      %p49 = por %p47, %p48
      %p51 = scmp.ne.s32.totalorder %s34, %s50
      %p52 = scmp.eq.s32.totalorder %s26, 0
      %p53 = por %p51, %p52
      %s55 = sadd.s32 %s54, 1
      %p58 = scmp.eq.s32.totalorder %s20, 1
      %p59 = scmp.ne.s32.totalorder %s54, %s56
      %p60 = scmp.eq.s32.totalorder %s20, 0
      %p61 = por %p59, %p60
      %p62 = scmp.ne.s32.totalorder %s54, %s56
      %p63 = scmp.eq.s32.totalorder %s25, 1
      %p64 = por %p62, %p63
      %p65 = scmp.ne.s32.totalorder %s56, %s57
      %p66 = scmp.eq.s32.totalorder %s25, 0
      %p67 = por %p65, %p66
      %p68 = scmp.ne.s32.totalorder %s56, %s57
      %p69 = scmp.eq.s32.totalorder %s26, 1
      %p70 = por %p68, %p69
      %p72 = scmp.ne.s32.totalorder %s57, %s71
      %p73 = scmp.eq.s32.totalorder %s26, 0
      %p74 = por %p72, %p73
      %s76 = sadd.s32 %s75, 1
      %p79 = scmp.eq.s32.totalorder %s20, 1
      %p80 = scmp.ne.s32.totalorder %s75, %s77
      %p81 = scmp.eq.s32.totalorder %s20, 0
      %p82 = por %p80, %p81
      %p83 = scmp.ne.s32.totalorder %s75, %s77
      %p84 = scmp.eq.s32.totalorder %s25, 1
      %p85 = por %p83, %p84
      %p86 = scmp.ne.s32.totalorder %s77, %s78
      %p87 = scmp.eq.s32.totalorder %s25, 0
      %p88 = por %p86, %p87
      %p89 = scmp.ne.s32.totalorder %s77, %s78
      %p90 = scmp.eq.s32.totalorder %s26, 1
      %p91 = por %p89, %p90
      %p93 = scmp.ne.s32.totalorder %s78, %s92
      %p94 = scmp.eq.s32.totalorder %s26, 0
      %p95 = por %p93, %p94
      %s97 = sadd.s32 %s96, 1
      %p100 = scmp.eq.s32.totalorder %s20, 1
      %p101 = scmp.ne.s32.totalorder %s96, %s98
      %p102 = scmp.eq.s32.totalorder %s20, 0
      %p103 = por %p101, %p102
      %p104 = scmp.ne.s32.totalorder %s96, %s98
      %p105 = scmp.eq.s32.totalorder %s25, 1
      %p106 = por %p104, %p105
      %p107 = scmp.ne.s32.totalorder %s98, %s99
      %p108 = scmp.eq.s32.totalorder %s25, 0
      %p109 = por %p107, %p108
      %p110 = scmp.ne.s32.totalorder %s98, %s99
      %p111 = scmp.eq.s32.totalorder %s26, 1
      %p112 = por %p110, %p111
      %p114 = scmp.ne.s32.totalorder %s99, %s113
      %p115 = scmp.eq.s32.totalorder %s26, 0
      %p116 = por %p114, %p115
      %s118 = sadd.s32 %s117, 1
      %p121 = scmp.eq.s32.totalorder %s20, 1
      %p122 = scmp.ne.s32.totalorder %s117, %s119
      %p123 = scmp.eq.s32.totalorder %s20, 0
      %p124 = por %p122, %p123
      %p125 = scmp.ne.s32.totalorder %s117, %s119
      %p126 = scmp.eq.s32.totalorder %s25, 1
      %p127 = por %p125, %p126
      %p128 = scmp.ne.s32.totalorder %s119, %s120
      %p129 = scmp.eq.s32.totalorder %s25, 0
      %p130 = por %p128, %p129
      %p131 = scmp.ne.s32.totalorder %s119, %s120
      %p132 = scmp.eq.s32.totalorder %s26, 1
      %p133 = por %p131, %p132
      %p135 = scmp.ne.s32.totalorder %s120, %s134
      %p136 = scmp.eq.s32.totalorder %s26, 0
      %p137 = por %p135, %p136
      %s139 = sadd.s32 %s138, 1
      %p142 = scmp.eq.s32.totalorder %s20, 1
      %p143 = scmp.ne.s32.totalorder %s138, %s140
      %p144 = scmp.eq.s32.totalorder %s20, 0
      %p145 = por %p143, %p144
      %p146 = scmp.ne.s32.totalorder %s138, %s140
      %p147 = scmp.eq.s32.totalorder %s25, 1
      %p148 = por %p146, %p147
      %p149 = scmp.ne.s32.totalorder %s140, %s141
      %p150 = scmp.eq.s32.totalorder %s25, 0
      %p151 = por %p149, %p150
      %p152 = scmp.ne.s32.totalorder %s140, %s141
      %p153 = scmp.eq.s32.totalorder %s26, 1
      %p154 = por %p152, %p153
      %p156 = scmp.ne.s32.totalorder %s141, %s155
      %p157 = scmp.eq.s32.totalorder %s26, 0
      %p158 = por %p156, %p157
      %s160 = sadd.s32 %s159, 1
      %p163 = scmp.eq.s32.totalorder %s20, 1
      %p164 = scmp.ne.s32.totalorder %s159, %s161
      %p165 = scmp.eq.s32.totalorder %s20, 0
      %p166 = por %p164, %p165
      %p167 = scmp.ne.s32.totalorder %s159, %s161
      %p168 = scmp.eq.s32.totalorder %s25, 1
      %p169 = por %p167, %p168
      %p170 = scmp.ne.s32.totalorder %s161, %s162
      %p171 = scmp.eq.s32.totalorder %s25, 0
      %p172 = por %p170, %p171
      %p173 = scmp.ne.s32.totalorder %s161, %s162
      %p174 = scmp.eq.s32.totalorder %s26, 1
      %p175 = por %p173, %p174
      %p177 = scmp.ne.s32.totalorder %s162, %s176
      %p178 = scmp.eq.s32.totalorder %s26, 0
      %p179 = por %p177, %p178
      %s181 = sadd.s32 %s180, 1
      %p184 = scmp.eq.s32.totalorder %s20, 1
      %p185 = scmp.ne.s32.totalorder %s180, %s182
      %p186 = scmp.eq.s32.totalorder %s20, 0
      %p187 = por %p185, %p186
      %p188 = scmp.ne.s32.totalorder %s180, %s182
      %p189 = scmp.eq.s32.totalorder %s25, 1
      %p190 = por %p188, %p189
      %p191 = scmp.ne.s32.totalorder %s182, %s183
      %p192 = scmp.eq.s32.totalorder %s25, 0
      %p193 = por %p191, %p192
      %p194 = scmp.ne.s32.totalorder %s182, %s183
      %p195 = scmp.eq.s32.totalorder %s26, 1
      %p196 = por %p194, %p195
      %p198 = scmp.ne.s32.totalorder %s183, %s197
      %p199 = scmp.eq.s32.totalorder %s26, 0
      %p200 = por %p198, %p199
      %s202 = sadd.s32 %s201, 1
      %p205 = scmp.eq.s32.totalorder %s20, 1
      %p206 = scmp.ne.s32.totalorder %s201, %s203
      %p207 = scmp.eq.s32.totalorder %s20, 0
      %p208 = por %p206, %p207
      %p209 = scmp.ne.s32.totalorder %s201, %s203
      %p210 = scmp.eq.s32.totalorder %s25, 1
      %p211 = por %p209, %p210
      %p212 = scmp.ne.s32.totalorder %s203, %s204
      %p213 = scmp.eq.s32.totalorder %s25, 0
      %p214 = por %p212, %p213
      %p215 = scmp.ne.s32.totalorder %s203, %s204
      %p216 = scmp.eq.s32.totalorder %s26, 1
      %p217 = por %p215, %p216
      %p219 = scmp.ne.s32.totalorder %s204, %s218
      %p220 = scmp.eq.s32.totalorder %s26, 0
      %p221 = por %p219, %p220
      %s223 = sadd.s32 %s222, 1
      %p226 = scmp.eq.s32.totalorder %s20, 1
      %p227 = scmp.ne.s32.totalorder %s222, %s224
      %p228 = scmp.eq.s32.totalorder %s20, 0
      %p229 = por %p227, %p228
      %p230 = scmp.ne.s32.totalorder %s222, %s224
      %p231 = scmp.eq.s32.totalorder %s25, 1
      %p232 = por %p230, %p231
      %p233 = scmp.ne.s32.totalorder %s224, %s225
      %p234 = scmp.eq.s32.totalorder %s25, 0
      %p235 = por %p233, %p234
      %p236 = scmp.ne.s32.totalorder %s224, %s225
      %p237 = scmp.eq.s32.totalorder %s26, 1
      %p238 = por %p236, %p237
      %p240 = scmp.ne.s32.totalorder %s225, %s239
      %p241 = scmp.eq.s32.totalorder %s26, 0
      %p242 = por %p240, %p241
      %s244 = sadd.s32 %s243, 1
      %p247 = scmp.eq.s32.totalorder %s20, 1
      %p248 = scmp.ne.s32.totalorder %s243, %s245
      %p249 = scmp.eq.s32.totalorder %s20, 0
      %p250 = por %p248, %p249
      %p251 = scmp.ne.s32.totalorder %s243, %s245
      %p252 = scmp.eq.s32.totalorder %s25, 1
      %p253 = por %p251, %p252
      %p254 = scmp.ne.s32.totalorder %s245, %s246
      %p255 = scmp.eq.s32.totalorder %s25, 0
      %p256 = por %p254, %p255
      %p257 = scmp.ne.s32.totalorder %s245, %s246
      %p258 = scmp.eq.s32.totalorder %s26, 1
      %p259 = por %p257, %p258
      %p261 = scmp.ne.s32.totalorder %s246, %s260
      %p262 = scmp.eq.s32.totalorder %s26, 0
      %p263 = por %p261, %p262
      %s264 = ssub.s32 %s20, %s27
      %p265 = scmp.eq.s32.totalorder %s264, 0
      %s267 = sadd.s32 %s266, 1
      %s268 = scalar_select %p265, %s266, %s267
      %p271 = pneg %p265
      %p272 = scmp.eq.s32.totalorder %s20, 1
      %p273 = por %p271, %p272
      %p274 = scmp.ne.s32.totalorder %s266, %s269
      %p275 = scmp.eq.s32.totalorder %s20, 0
      %p276 = por %p274, %p275
      %p277 = scmp.ne.s32.totalorder %s266, %s269
      %p278 = scmp.eq.s32.totalorder %s25, 1
      %p279 = por %p277, %p278
      %p280 = scmp.ne.s32.totalorder %s269, %s270
      %p281 = scmp.eq.s32.totalorder %s25, 0
      %p282 = por %p280, %p281
      %p283 = scmp.ne.s32.totalorder %s269, %s270
      %p284 = scmp.eq.s32.totalorder %s26, 1
      %p285 = por %p283, %p284
      %p287 = scmp.ne.s32.totalorder %s270, %s286
      %p288 = scmp.eq.s32.totalorder %s26, 0
      %p289 = por %p287, %p288
      %p290 = scmp.le.s32.totalorder 1, %s20
      %p291 = scmp.lt.s32.totalorder %s20, 3
      %p292 = pnand %p290, %p291
      %p293 = pneg %p292
      // Predicated region
      $region9: #{_forward_padded.1} parent=5 // pred_check
        _
      $region10: #{_forward_padded.1} parent=5 // pred_check_branch
        %295 = sbr.rel (%p292) target = $region12
      $region11: #{_forward_padded.1} parent=5 // pred_region
        %s296 = ssub.s32 %s20, 1
        // Predicated region
        $region13: #{_forward_padded.1} parent=11 // pred_check
          %p297 = pneg %p67
        $region14: #{_forward_padded.1} parent=11 // pred_check_branch
          %299 = sbr.rel (%p297) target = $region16
        $region15: #{_forward_padded.1} parent=11 // pred_region
          _
        $region16: #{_forward_padded.1} parent=11 // pred_fallthru
          _
        // Predicated region
        $region17: #{_forward_padded.1} parent=11 // pred_check
          %p300 = pneg %p88
        $region18: #{_forward_padded.1} parent=11 // pred_check_branch
          %302 = sbr.rel (%p300) target = $region20
        $region19: #{_forward_padded.1} parent=11 // pred_region
          _
        $region20: #{_forward_padded.1} parent=11 // pred_fallthru
          _
        // Predicated region
        $region21: #{_forward_padded.1} parent=11 // pred_check
          %p303 = pneg %p109
        $region22: #{_forward_padded.1} parent=11 // pred_check_branch
          %305 = sbr.rel (%p303) target = $region24
        $region23: #{_forward_padded.1} parent=11 // pred_region
          %s307 = ssub.s32 1024, 1024
          %308 = vsyncadd [#allocation3], %s307
          %s309 = sshll.u32 [#allocation2], 4
          %s310 = int_to_ptr.vmem [resolvable:$true] %s309
          %315 = dma.hbm_to_vmem [thread:$0]  %s3, 1024, %s310, [#allocation3], 64, 64, 4
        $region24: #{_forward_padded.1} parent=11 // pred_fallthru
          _
        // Predicated region
        $region25: #{_forward_padded.1} parent=11 // pred_check
          %p316 = pneg %p130
        $region26: #{_forward_padded.1} parent=11 // pred_check_branch
          %318 = sbr.rel (%p316) target = $region28
        $region27: #{_forward_padded.1} parent=11 // pred_region
          _
        $region28: #{_forward_padded.1} parent=11 // pred_fallthru
          _
        // Predicated region
        $region29: #{_forward_padded.1} parent=11 // pred_check
          %p319 = pneg %p151
        $region30: #{_forward_padded.1} parent=11 // pred_check_branch
          %321 = sbr.rel (%p319) target = $region32
        $region31: #{_forward_padded.1} parent=11 // pred_region
          %s323 = ssub.s32 1024, 1024
          %324 = vsyncadd [#allocation5], %s323
          %s325 = sshll.u32 [#allocation4], 4
          %s326 = int_to_ptr.vmem [resolvable:$true] %s325
          %331 = dma.hbm_to_vmem [thread:$0]  %s5, 1024, %s326, [#allocation5], 64, 64, 4
        $region32: #{_forward_padded.1} parent=11 // pred_fallthru
          _
        // Predicated region
        $region33: #{_forward_padded.1} parent=11 // pred_check
          %p332 = pneg %p172
        $region34: #{_forward_padded.1} parent=11 // pred_check_branch
          %334 = sbr.rel (%p332) target = $region36
        $region35: #{_forward_padded.1} parent=11 // pred_region
          _
        $region36: #{_forward_padded.1} parent=11 // pred_fallthru
          _
        // Predicated region
        $region37: #{_forward_padded.1} parent=11 // pred_check
          %p335 = pneg %p193
        $region38: #{_forward_padded.1} parent=11 // pred_check_branch
          %337 = sbr.rel (%p335) target = $region40
        $region39: #{_forward_padded.1} parent=11 // pred_region
          %s339 = ssub.s32 1024, 1024
          %340 = vsyncadd [#allocation5], %s339
          %s341 = sshll.u32 [#allocation6], 4
          %s342 = int_to_ptr.vmem [resolvable:$true] %s341
          %347 = dma.hbm_to_vmem [thread:$0]  %s7, 1024, %s342, [#allocation5], 64, 64, 4
        $region40: #{_forward_padded.1} parent=11 // pred_fallthru
          _
        // Predicated region
        $region41: #{_forward_padded.1} parent=11 // pred_check
          %p348 = pneg %p214
        $region42: #{_forward_padded.1} parent=11 // pred_check_branch
          %350 = sbr.rel (%p348) target = $region44
        $region43: #{_forward_padded.1} parent=11 // pred_region
          _
        $region44: #{_forward_padded.1} parent=11 // pred_fallthru
          _
        // Predicated region
        $region45: #{_forward_padded.1} parent=11 // pred_check
          %p351 = pneg %p235
        $region46: #{_forward_padded.1} parent=11 // pred_check_branch
          %353 = sbr.rel (%p351) target = $region48
        $region47: #{_forward_padded.1} parent=11 // pred_region
          %s355 = ssub.s32 1024, 1024
          %356 = vsyncadd [#allocation8], %s355
          %s357 = sshll.u32 [#allocation7], 4
          %s358 = int_to_ptr.vmem [resolvable:$true] %s357
          %363 = dma.hbm_to_vmem [thread:$0]  %s9, 1024, %s358, [#allocation8], 64, 64, 4
        $region48: #{_forward_padded.1} parent=11 // pred_fallthru
          _
        // Predicated region
        $region49: #{_forward_padded.1} parent=11 // pred_check
          %p364 = pneg %p256
        $region50: #{_forward_padded.1} parent=11 // pred_check_branch
          %366 = sbr.rel (%p364) target = $region52
        $region51: #{_forward_padded.1} parent=11 // pred_region
          _
        $region52: #{_forward_padded.1} parent=11 // pred_fallthru
          _
      $region12: #{_forward_padded.1} parent=5 // pred_fallthru
        _
      %p367 = scmp.lt.s32.totalorder %s20, 2
      // Predicated region
      $region53: #{_forward_padded.1} parent=5 // pred_check
        %p368 = pneg %p367
      $region54: #{_forward_padded.1} parent=5 // pred_check_branch
        %370 = sbr.rel (%p368) target = $region56
      $region55: #{_forward_padded.1} parent=5 // pred_region
        // Predicated region
        $region57: #{_forward_padded.1} parent=55 // pred_check
          %p371 = pneg %p40
        $region58: #{_forward_padded.1} parent=55 // pred_check_branch
          %373 = sbr.rel (%p371) target = $region60
        $region59: #{_forward_padded.1} parent=55 // pred_region
          %p374 = scmp.lt.s32.totalorder %s20, 1
          %s375 = scalar_select %p374, %s20, 1
          %s376 = smul.addr %s375, 8
          %s377 = scalar_lea.vmem %s0, %s376
        $region60: #{_forward_padded.1} parent=55 // pred_fallthru
          _
      $region56: #{_forward_padded.1} parent=5 // pred_fallthru
        _
      %p378 = scmp.le.s32.totalorder 1, %s20
      %p379 = scmp.lt.s32.totalorder %s20, 3
      %p380 = pnand %p378, %p379
      %p381 = pneg %p380
      // Predicated region
      $region61: #{_forward_padded.1} parent=5 // pred_check
        _
      $region62: #{_forward_padded.1} parent=5 // pred_check_branch
        %383 = sbr.rel (%p380) target = $region64
      $region63: #{_forward_padded.1} parent=5 // pred_region
        %s384 = ssub.s32 %s20, 1
        // Predicated region
        $region65: #{_forward_padded.1} parent=63 // pred_check
          %p385 = pneg %p109
        $region66: #{_forward_padded.1} parent=63 // pred_check_branch
          %387 = sbr.rel (%p385) target = $region68
        $region67: #{_forward_padded.1} parent=63 // pred_region
          %388 = dma.done [#allocation3], 1024
        $region68: #{_forward_padded.1} parent=63 // pred_fallthru
          _
        // Predicated region
        $region69: #{_forward_padded.1} parent=63 // pred_check
          %p389 = pneg %p151
        $region70: #{_forward_padded.1} parent=63 // pred_check_branch
          %391 = sbr.rel (%p389) target = $region72
        $region71: #{_forward_padded.1} parent=63 // pred_region
          %392 = dma.done [#allocation5], 1024
        $region72: #{_forward_padded.1} parent=63 // pred_fallthru
          _
        // Predicated region
        $region73: #{_forward_padded.1} parent=63 // pred_check
          %p393 = pneg %p193
        $region74: #{_forward_padded.1} parent=63 // pred_check_branch
          %395 = sbr.rel (%p393) target = $region76
        $region75: #{_forward_padded.1} parent=63 // pred_region
          %396 = dma.done [#allocation5], 1024
        $region76: #{_forward_padded.1} parent=63 // pred_fallthru
          _
        // Predicated region
        $region77: #{_forward_padded.1} parent=63 // pred_check
          %p397 = pneg %p235
        $region78: #{_forward_padded.1} parent=63 // pred_check_branch
          %399 = sbr.rel (%p397) target = $region80
        $region79: #{_forward_padded.1} parent=63 // pred_region
          %400 = dma.done [#allocation8], 1024
        $region80: #{_forward_padded.1} parent=63 // pred_fallthru
          _
        %p401 = scmp.lt.s32.totalorder %s25, 1
        %s402 = scalar_select %p401, %s25, 1
        %s403 = smul.addr %s402, 8
        %s404 = scalar_lea.vmem %s0, %s403
        %p405 = pneg %p46
        %p406 = pneg %p43
        %p407 = pneg %p67
        %p408 = pneg %p64
        %p409 = pneg %p88
        %p410 = pneg %p85
        %p411 = pneg %p109
        %p412 = pneg %p106
        %p413 = pneg %p130
        %p414 = pneg %p127
        %p415 = pneg %p151
        %p416 = pneg %p148
        %p417 = pneg %p172
        %p418 = pneg %p169
        %p419 = pneg %p193
        %p420 = pneg %p190
        %p421 = pneg %p214
        %p422 = pneg %p211
        %p423 = pneg %p235
        %p424 = pneg %p232
        %p425 = pneg %p256
        %p426 = pneg %p253
        %p427 = pneg %p282
        %p428 = pneg %p279
        %p429 = scmp.lt.s32.totalorder %s25, 1
        %s430 = scalar_select %p429, %s25, 1
        %s431 = smul.addr %s430, 8
        %s432 = scalar_lea.vmem %s11, %s431
        %p433 = scmp.lt.s32.totalorder %s25, 1
        %s434 = scalar_select %p433, %s25, 1
        %s435 = smul.addr %s434, 8
        %s436 = scalar_lea.vmem %s0, %s435
        %p437 = scmp.lt.s32.totalorder %s25, 1
        %s438 = scalar_select %p437, %s25, 1
        %s439 = smul.addr %s438, 8
        %s440 = scalar_lea.vmem %s11, %s439
        %v442 = vld [vmem:[%s436] sm:$0xff]
        %v443 = vld [vmem:[%s1] sm:$0x1]
        %445 = vset.pattern.permute.xlu0 0
        %446 = vperm.xlu0 %445, %v442
        %v447 = vpop.permute.xlu0 %446
        %v449 = vlaneseq
        %v450 = vshrl.u32 %v449, 7
        %v451 = vsub.s32 0, %v450
        %v452 = vrot.slane %v443, %v451
        %v453 = vmul.f32 %v447, %v452
        %v454 = vld [vmem:[%s1 + $0x1] sm:$0x1]
        %455 = vset.pattern.permute.xlu0 1
        %456 = vperm.xlu0 %455, %v442
        %v457 = vpop.permute.xlu0 %456
        %v459 = vlaneseq
        %v460 = vshrl.u32 %v459, 7
        %v461 = vsub.s32 0, %v460
        %v462 = vrot.slane %v454, %v461
        %v463 = vmul.f32 %v457, %v462
        %v464 = vadd.f32 %v453, %v463
        %v465 = vld [vmem:[%s2] sm:$0x1]
        %v467 = vlaneseq
        %v468 = vshrl.u32 %v467, 7
        %v469 = vsub.s32 0, %v468
        %v470 = vrot.slane %v465, %v469
        %v472 = vadd.f32 %v464, %v470
        %v473 = vmax.f32 %v472, 0.0
        %v474 = vand.u32 2147483647, %v472
        %v475 = vsub.f32 0.0, %v474
        %v476 = vmul.f32 %v475, 1.442695
        %v477 = vpow.pop %v476
        %v478 = vadd.f32 %v477, 1.0
        %v479 = vlog2.pop %v478
        %v480 = vmul.f32 %v479, 0.6931472
        %v481 = vmul.f32 -0.5, %v477
        %v482 = vadd.f32 %v481, 1.0
        %v483 = vmul.f32 %v482, %v477
        %v484 = vand.u32 2147483647, %v477
        %vm485 = vcmp.lt.f32.partialorder %v484, 0.0004427343
        %v486 = vsel %vm485, %v483, %v480
        %v487 = vadd.f32 %v473, %v486
        %v488 = vpack.c.bf16 %v487, %v487
        %v489 = vld [vmem:[#allocation2] sm:$0xf]
        %v490 = vld [vmem:[#allocation2 + $0x4] sm:$0xf]
        %v491 = vld [vmem:[#allocation2 + $0x8] sm:$0xf]
        %v492 = vld [vmem:[#allocation2 + $0xc] sm:$0xf]
        %v493 = vld [vmem:[#allocation2 + $0x10] sm:$0xf]
        %v494 = vld [vmem:[#allocation2 + $0x14] sm:$0xf]
        %v495 = vld [vmem:[#allocation2 + $0x18] sm:$0xf]
        %v496 = vld [vmem:[#allocation2 + $0x1c] sm:$0xf]
        %v497 = vld [vmem:[#allocation2 + $0x20] sm:$0xf]
        %v498 = vld [vmem:[#allocation2 + $0x24] sm:$0xf]
        %v499 = vld [vmem:[#allocation2 + $0x28] sm:$0xf]
        %v500 = vld [vmem:[#allocation2 + $0x2c] sm:$0xf]
        %v501 = vld [vmem:[#allocation2 + $0x30] sm:$0xf]
        %v502 = vld [vmem:[#allocation2 + $0x34] sm:$0xf]
        %v503 = vld [vmem:[#allocation2 + $0x38] sm:$0xf]
        %v504 = vld [vmem:[#allocation2 + $0x3c] sm:$0xf]
        %v505 = vld [vmem:[%s4] sm:$0x1]
        %v507 = vlaneseq
        %v508 = vshrl.u32 %v507, 7
        %v509 = vsub.s32 0, %v508
        %v510 = vrot.slane %v505, %v509
        %v528 = vunpack.c.l.b16 %v489
        %v529 = vunpack.c.l.b16 %v490
        %v530 = vunpack.c.l.b16 %v491
        %v531 = vunpack.c.l.b16 %v492
        %v532 = vunpack.c.l.b16 %v493
        %v533 = vunpack.c.l.b16 %v494
        %v534 = vunpack.c.l.b16 %v495
        %v535 = vunpack.c.l.b16 %v496
        %v536 = vunpack.c.l.b16 %v497
        %v537 = vunpack.c.l.b16 %v498
        %v538 = vunpack.c.l.b16 %v499
        %v539 = vunpack.c.l.b16 %v500
        %v540 = vunpack.c.l.b16 %v501
        %v541 = vunpack.c.l.b16 %v502
        %v542 = vunpack.c.l.b16 %v503
        %v543 = vunpack.c.l.b16 %v504
        %v544 = vpack.c.b16 %v529, %v528
        %v545 = vpack.c.b16 %v531, %v530
        %v546 = vpack.c.b16 %v533, %v532
        %v547 = vpack.c.b16 %v535, %v534
        %v548 = vpack.c.b16 %v537, %v536
        %v549 = vpack.c.b16 %v539, %v538
        %v550 = vpack.c.b16 %v541, %v540
        %v551 = vpack.c.b16 %v543, %v542
        %560 = vmatprep.subr.bf16.mxu0 0
        %561 = vmatpush1.bf16.msra.mxu0 %v544
        %562 = vmatprep.subr.bf16.mxu0 0
        %563 = vmatpush1.bf16.msra.mxu0 %v545
        %564 = vmatprep.subr.bf16.mxu0 0
        %565 = vmatpush1.bf16.msra.mxu0 %v546
        %566 = vmatprep.subr.bf16.mxu0 0
        %567 = vmatpush1.bf16.msra.mxu0 %v547
        %568 = vmatprep.subr.bf16.mxu0 0
        %569 = vmatpush1.bf16.msra.mxu0 %v548
        %570 = vmatprep.subr.bf16.mxu0 0
        %571 = vmatpush1.bf16.msra.mxu0 %v549
        %572 = vmatprep.subr.bf16.mxu0 0
        %573 = vmatpush1.bf16.msra.mxu0 %v550
        %574 = vmatprep.subr.bf16.mxu0 0
        %575 = vmatpush1.bf16.msra.mxu0 %v551
        %576 = vmatprep.subr.bf16.mxu0 0
        %577 = vmatpush1.bf16.msra.mxu0 0
        %578 = vmatprep.subr.bf16.mxu0 0
        %579 = vmatpush1.bf16.msra.mxu0 0
        %580 = vmatprep.subr.bf16.mxu0 0
        %581 = vmatpush1.bf16.msra.mxu0 0
        %582 = vmatprep.subr.bf16.mxu0 0
        %583 = vmatpush1.bf16.msra.mxu0 0
        %584 = vmatprep.subr.bf16.mxu0 0
        %585 = vmatpush1.bf16.msra.mxu0 0
        %586 = vmatprep.subr.bf16.mxu0 0
        %587 = vmatpush1.bf16.msra.mxu0 0
        %588 = vmatprep.subr.bf16.mxu0 0
        %589 = vmatpush1.bf16.msra.mxu0 0
        %590 = vmatprep.subr.bf16.mxu0 0
        %591 = vmatpush1.bf16.msra.mxu0 0
        %592 = vmatprep.mubr.bf16.mxu0 0
        %593 = vmatmul.mubr.bf16.gmra.mrb[0].mxu0 %v488
        %v594 = vpop.f32.mrb[0].mxu0
        %v595 = vadd.f32 %v510, %v594
        %v596 = vpop.f32.mrb[0].mxu0
        %v597 = vpop.f32.mrb[0].mxu0
        %v598 = vpop.f32.mrb[0].mxu0
        %599 = vdwg.mxu0
        %v600 = vmax.f32 %v595, 0.0
        %v601 = vand.u32 2147483647, %v595
        %v602 = vsub.f32 0.0, %v601
        %v603 = vmul.f32 %v602, 1.442695
        %v604 = vpow.pop %v603
        %v605 = vadd.f32 %v604, 1.0
        %v606 = vlog2.pop %v605
        %v607 = vmul.f32 %v606, 0.6931472
        %v608 = vmul.f32 -0.5, %v604
        %v609 = vadd.f32 %v608, 1.0
        %v610 = vmul.f32 %v609, %v604
        %v611 = vand.u32 2147483647, %v604
        %vm612 = vcmp.lt.f32.partialorder %v611, 0.0004427343
        %v613 = vsel %vm612, %v610, %v607
        %v614 = vadd.f32 %v600, %v613
        %v615 = vpack.c.bf16 %v614, %v614
        %v616 = vld [vmem:[#allocation4] sm:$0xf]
        %v617 = vld [vmem:[#allocation4 + $0x4] sm:$0xf]
        %v618 = vld [vmem:[#allocation4 + $0x8] sm:$0xf]
        %v619 = vld [vmem:[#allocation4 + $0xc] sm:$0xf]
        %v620 = vld [vmem:[#allocation4 + $0x10] sm:$0xf]
        %v621 = vld [vmem:[#allocation4 + $0x14] sm:$0xf]
        %v622 = vld [vmem:[#allocation4 + $0x18] sm:$0xf]
        %v623 = vld [vmem:[#allocation4 + $0x1c] sm:$0xf]
        %v624 = vld [vmem:[#allocation4 + $0x20] sm:$0xf]
        %v625 = vld [vmem:[#allocation4 + $0x24] sm:$0xf]
        %v626 = vld [vmem:[#allocation4 + $0x28] sm:$0xf]
        %v627 = vld [vmem:[#allocation4 + $0x2c] sm:$0xf]
        %v628 = vld [vmem:[#allocation4 + $0x30] sm:$0xf]
        %v629 = vld [vmem:[#allocation4 + $0x34] sm:$0xf]
        %v630 = vld [vmem:[#allocation4 + $0x38] sm:$0xf]
        %v631 = vld [vmem:[#allocation4 + $0x3c] sm:$0xf]
        %v632 = vld [vmem:[%s6] sm:$0x1]
        %v634 = vlaneseq
        %v635 = vshrl.u32 %v634, 7
        %v636 = vsub.s32 0, %v635
        %v637 = vrot.slane %v632, %v636
        %v655 = vunpack.c.l.b16 %v616
        %v656 = vunpack.c.l.b16 %v617
        %v657 = vunpack.c.l.b16 %v618
        %v658 = vunpack.c.l.b16 %v619
        %v659 = vunpack.c.l.b16 %v620
        %v660 = vunpack.c.l.b16 %v621
        %v661 = vunpack.c.l.b16 %v622
        %v662 = vunpack.c.l.b16 %v623
        %v663 = vunpack.c.l.b16 %v624
        %v664 = vunpack.c.l.b16 %v625
        %v665 = vunpack.c.l.b16 %v626
        %v666 = vunpack.c.l.b16 %v627
        %v667 = vunpack.c.l.b16 %v628
        %v668 = vunpack.c.l.b16 %v629
        %v669 = vunpack.c.l.b16 %v630
        %v670 = vunpack.c.l.b16 %v631
        %v671 = vpack.c.b16 %v656, %v655
        %v672 = vpack.c.b16 %v658, %v657
        %v673 = vpack.c.b16 %v660, %v659
        %v674 = vpack.c.b16 %v662, %v661
        %v675 = vpack.c.b16 %v664, %v663
        %v676 = vpack.c.b16 %v666, %v665
        %v677 = vpack.c.b16 %v668, %v667
        %v678 = vpack.c.b16 %v670, %v669
        %687 = vmatprep.subr.bf16.mxu0 0
        %688 = vmatpush1.bf16.msra.mxu0 %v671
        %689 = vmatprep.subr.bf16.mxu0 0
        %690 = vmatpush1.bf16.msra.mxu0 %v672
        %691 = vmatprep.subr.bf16.mxu0 0
        %692 = vmatpush1.bf16.msra.mxu0 %v673
        %693 = vmatprep.subr.bf16.mxu0 0
        %694 = vmatpush1.bf16.msra.mxu0 %v674
        %695 = vmatprep.subr.bf16.mxu0 0
        %696 = vmatpush1.bf16.msra.mxu0 %v675
        %697 = vmatprep.subr.bf16.mxu0 0
        %698 = vmatpush1.bf16.msra.mxu0 %v676
        %699 = vmatprep.subr.bf16.mxu0 0
        %700 = vmatpush1.bf16.msra.mxu0 %v677
        %701 = vmatprep.subr.bf16.mxu0 0
        %702 = vmatpush1.bf16.msra.mxu0 %v678
        %703 = vmatprep.subr.bf16.mxu0 0
        %704 = vmatpush1.bf16.msra.mxu0 0
        %705 = vmatprep.subr.bf16.mxu0 0
        %706 = vmatpush1.bf16.msra.mxu0 0
        %707 = vmatprep.subr.bf16.mxu0 0
        %708 = vmatpush1.bf16.msra.mxu0 0
        %709 = vmatprep.subr.bf16.mxu0 0
        %710 = vmatpush1.bf16.msra.mxu0 0
        %711 = vmatprep.subr.bf16.mxu0 0
        %712 = vmatpush1.bf16.msra.mxu0 0
        %713 = vmatprep.subr.bf16.mxu0 0
        %714 = vmatpush1.bf16.msra.mxu0 0
        %715 = vmatprep.subr.bf16.mxu0 0
        %716 = vmatpush1.bf16.msra.mxu0 0
        %717 = vmatprep.subr.bf16.mxu0 0
        %718 = vmatpush1.bf16.msra.mxu0 0
        %719 = vmatprep.mubr.bf16.mxu0 0
        %720 = vmatmul.mubr.bf16.gmra.mrb[0].mxu0 %v615
        %v721 = vpop.f32.mrb[0].mxu0
        %v722 = vadd.f32 %v637, %v721
        %v723 = vpop.f32.mrb[0].mxu0
        %v724 = vpop.f32.mrb[0].mxu0
        %v725 = vpop.f32.mrb[0].mxu0
        %726 = vdwg.mxu0
        %v727 = vmax.f32 %v722, 0.0
        %v728 = vand.u32 2147483647, %v722
        %v729 = vsub.f32 0.0, %v728
        %v730 = vmul.f32 %v729, 1.442695
        %v731 = vpow.pop %v730
        %v732 = vadd.f32 %v731, 1.0
        %v733 = vlog2.pop %v732
        %v734 = vmul.f32 %v733, 0.6931472
        %v735 = vmul.f32 -0.5, %v731
        %v736 = vadd.f32 %v735, 1.0
        %v737 = vmul.f32 %v736, %v731
        %v738 = vand.u32 2147483647, %v731
        %vm739 = vcmp.lt.f32.partialorder %v738, 0.0004427343
        %v740 = vsel %vm739, %v737, %v734
        %v741 = vadd.f32 %v727, %v740
        %v742 = vpack.c.bf16 %v741, %v741
        %v743 = vld [vmem:[#allocation6] sm:$0xf]
        %v744 = vld [vmem:[#allocation6 + $0x4] sm:$0xf]
        %v745 = vld [vmem:[#allocation6 + $0x8] sm:$0xf]
        %v746 = vld [vmem:[#allocation6 + $0xc] sm:$0xf]
        %v747 = vld [vmem:[#allocation6 + $0x10] sm:$0xf]
        %v748 = vld [vmem:[#allocation6 + $0x14] sm:$0xf]
        %v749 = vld [vmem:[#allocation6 + $0x18] sm:$0xf]
        %v750 = vld [vmem:[#allocation6 + $0x1c] sm:$0xf]
        %v751 = vld [vmem:[#allocation6 + $0x20] sm:$0xf]
        %v752 = vld [vmem:[#allocation6 + $0x24] sm:$0xf]
        %v753 = vld [vmem:[#allocation6 + $0x28] sm:$0xf]
        %v754 = vld [vmem:[#allocation6 + $0x2c] sm:$0xf]
        %v755 = vld [vmem:[#allocation6 + $0x30] sm:$0xf]
        %v756 = vld [vmem:[#allocation6 + $0x34] sm:$0xf]
        %v757 = vld [vmem:[#allocation6 + $0x38] sm:$0xf]
        %v758 = vld [vmem:[#allocation6 + $0x3c] sm:$0xf]
        %v759 = vld [vmem:[%s8] sm:$0x1]
        %v761 = vlaneseq
        %v762 = vshrl.u32 %v761, 7
        %v763 = vsub.s32 0, %v762
        %v764 = vrot.slane %v759, %v763
        %v782 = vunpack.c.l.b16 %v743
        %v783 = vunpack.c.l.b16 %v744
        %v784 = vunpack.c.l.b16 %v745
        %v785 = vunpack.c.l.b16 %v746
        %v786 = vunpack.c.l.b16 %v747
        %v787 = vunpack.c.l.b16 %v748
        %v788 = vunpack.c.l.b16 %v749
        %v789 = vunpack.c.l.b16 %v750
        %v790 = vunpack.c.l.b16 %v751
        %v791 = vunpack.c.l.b16 %v752
        %v792 = vunpack.c.l.b16 %v753
        %v793 = vunpack.c.l.b16 %v754
        %v794 = vunpack.c.l.b16 %v755
        %v795 = vunpack.c.l.b16 %v756
        %v796 = vunpack.c.l.b16 %v757
        %v797 = vunpack.c.l.b16 %v758
        %v798 = vpack.c.b16 %v783, %v782
        %v799 = vpack.c.b16 %v785, %v784
        %v800 = vpack.c.b16 %v787, %v786
        %v801 = vpack.c.b16 %v789, %v788
        %v802 = vpack.c.b16 %v791, %v790
        %v803 = vpack.c.b16 %v793, %v792
        %v804 = vpack.c.b16 %v795, %v794
        %v805 = vpack.c.b16 %v797, %v796
        %814 = vmatprep.subr.bf16.mxu0 0
        %815 = vmatpush1.bf16.msra.mxu0 %v798
        %816 = vmatprep.subr.bf16.mxu0 0
        %817 = vmatpush1.bf16.msra.mxu0 %v799
        %818 = vmatprep.subr.bf16.mxu0 0
        %819 = vmatpush1.bf16.msra.mxu0 %v800
        %820 = vmatprep.subr.bf16.mxu0 0
        %821 = vmatpush1.bf16.msra.mxu0 %v801
        %822 = vmatprep.subr.bf16.mxu0 0
        %823 = vmatpush1.bf16.msra.mxu0 %v802
        %824 = vmatprep.subr.bf16.mxu0 0
        %825 = vmatpush1.bf16.msra.mxu0 %v803
        %826 = vmatprep.subr.bf16.mxu0 0
        %827 = vmatpush1.bf16.msra.mxu0 %v804
        %828 = vmatprep.subr.bf16.mxu0 0
        %829 = vmatpush1.bf16.msra.mxu0 %v805
        %830 = vmatprep.subr.bf16.mxu0 0
        %831 = vmatpush1.bf16.msra.mxu0 0
        %832 = vmatprep.subr.bf16.mxu0 0
        %833 = vmatpush1.bf16.msra.mxu0 0
        %834 = vmatprep.subr.bf16.mxu0 0
        %835 = vmatpush1.bf16.msra.mxu0 0
        %836 = vmatprep.subr.bf16.mxu0 0
        %837 = vmatpush1.bf16.msra.mxu0 0
        %838 = vmatprep.subr.bf16.mxu0 0
        %839 = vmatpush1.bf16.msra.mxu0 0
        %840 = vmatprep.subr.bf16.mxu0 0
        %841 = vmatpush1.bf16.msra.mxu0 0
        %842 = vmatprep.subr.bf16.mxu0 0
        %843 = vmatpush1.bf16.msra.mxu0 0
        %844 = vmatprep.subr.bf16.mxu0 0
        %845 = vmatpush1.bf16.msra.mxu0 0
        %846 = vmatprep.mubr.bf16.mxu0 0
        %847 = vmatmul.mubr.bf16.gmra.mrb[0].mxu0 %v742
        %v848 = vpop.f32.mrb[0].mxu0
        %v849 = vadd.f32 %v764, %v848
        %v850 = vpop.f32.mrb[0].mxu0
        %v851 = vpop.f32.mrb[0].mxu0
        %v852 = vpop.f32.mrb[0].mxu0
        %853 = vdwg.mxu0
        %v854 = vmax.f32 %v849, 0.0
        %v855 = vand.u32 2147483647, %v849
        %v856 = vsub.f32 0.0, %v855
        %v857 = vmul.f32 %v856, 1.442695
        %v858 = vpow.pop %v857
        %v859 = vadd.f32 %v858, 1.0
        %v860 = vlog2.pop %v859
        %v861 = vmul.f32 %v860, 0.6931472
        %v862 = vmul.f32 -0.5, %v858
        %v863 = vadd.f32 %v862, 1.0
        %v864 = vmul.f32 %v863, %v858
        %v865 = vand.u32 2147483647, %v858
        %vm866 = vcmp.lt.f32.partialorder %v865, 0.0004427343
        %v867 = vsel %vm866, %v864, %v861
        %v868 = vadd.f32 %v854, %v867
        %v869 = vpack.c.bf16 %v868, %v868
        %v870 = vld [vmem:[#allocation7] sm:$0xf]
        %v871 = vld [vmem:[#allocation7 + $0x4] sm:$0xf]
        %v872 = vld [vmem:[#allocation7 + $0x8] sm:$0xf]
        %v873 = vld [vmem:[#allocation7 + $0xc] sm:$0xf]
        %v874 = vld [vmem:[#allocation7 + $0x10] sm:$0xf]
        %v875 = vld [vmem:[#allocation7 + $0x14] sm:$0xf]
        %v876 = vld [vmem:[#allocation7 + $0x18] sm:$0xf]
        %v877 = vld [vmem:[#allocation7 + $0x1c] sm:$0xf]
        %v878 = vld [vmem:[#allocation7 + $0x20] sm:$0xf]
        %v879 = vld [vmem:[#allocation7 + $0x24] sm:$0xf]
        %v880 = vld [vmem:[#allocation7 + $0x28] sm:$0xf]
        %v881 = vld [vmem:[#allocation7 + $0x2c] sm:$0xf]
        %v882 = vld [vmem:[#allocation7 + $0x30] sm:$0xf]
        %v883 = vld [vmem:[#allocation7 + $0x34] sm:$0xf]
        %v884 = vld [vmem:[#allocation7 + $0x38] sm:$0xf]
        %v885 = vld [vmem:[#allocation7 + $0x3c] sm:$0xf]
        %v886 = vld [vmem:[%s10] sm:$0x1]
        %v888 = vlaneseq
        %v889 = vshrl.u32 %v888, 7
        %v890 = vsub.s32 0, %v889
        %v891 = vrot.slane %v886, %v890
        %v909 = vunpack.c.l.b16 %v870
        %v910 = vunpack.c.l.b16 %v871
        %v911 = vunpack.c.l.b16 %v872
        %v912 = vunpack.c.l.b16 %v873
        %v913 = vunpack.c.l.b16 %v874
        %v914 = vunpack.c.l.b16 %v875
        %v915 = vunpack.c.l.b16 %v876
        %v916 = vunpack.c.l.b16 %v877
        %v917 = vunpack.c.l.b16 %v878
        %v918 = vunpack.c.l.b16 %v879
        %v919 = vunpack.c.l.b16 %v880
        %v920 = vunpack.c.l.b16 %v881
        %v921 = vunpack.c.l.b16 %v882
        %v922 = vunpack.c.l.b16 %v883
        %v923 = vunpack.c.l.b16 %v884
        %v924 = vunpack.c.l.b16 %v885
        %v925 = vpack.c.b16 %v910, %v909
        %v926 = vpack.c.b16 %v912, %v911
        %v927 = vpack.c.b16 %v914, %v913
        %v928 = vpack.c.b16 %v916, %v915
        %v929 = vpack.c.b16 %v918, %v917
        %v930 = vpack.c.b16 %v920, %v919
        %v931 = vpack.c.b16 %v922, %v921
        %v932 = vpack.c.b16 %v924, %v923
        %941 = vmatprep.subr.bf16.mxu0 0
        %942 = vmatpush1.bf16.msra.mxu0 %v925
        %943 = vmatprep.subr.bf16.mxu0 0
        %944 = vmatpush1.bf16.msra.mxu0 %v926
        %945 = vmatprep.subr.bf16.mxu0 0
        %946 = vmatpush1.bf16.msra.mxu0 %v927
        %947 = vmatprep.subr.bf16.mxu0 0
        %948 = vmatpush1.bf16.msra.mxu0 %v928
        %949 = vmatprep.subr.bf16.mxu0 0
        %950 = vmatpush1.bf16.msra.mxu0 %v929
        %951 = vmatprep.subr.bf16.mxu0 0
        %952 = vmatpush1.bf16.msra.mxu0 %v930
        %953 = vmatprep.subr.bf16.mxu0 0
        %954 = vmatpush1.bf16.msra.mxu0 %v931
        %955 = vmatprep.subr.bf16.mxu0 0
        %956 = vmatpush1.bf16.msra.mxu0 %v932
        %957 = vmatprep.subr.bf16.mxu0 0
        %958 = vmatpush1.bf16.msra.mxu0 0
        %959 = vmatprep.subr.bf16.mxu0 0
        %960 = vmatpush1.bf16.msra.mxu0 0
        %961 = vmatprep.subr.bf16.mxu0 0
        %962 = vmatpush1.bf16.msra.mxu0 0
        %963 = vmatprep.subr.bf16.mxu0 0
        %964 = vmatpush1.bf16.msra.mxu0 0
        %965 = vmatprep.subr.bf16.mxu0 0
        %966 = vmatpush1.bf16.msra.mxu0 0
        %967 = vmatprep.subr.bf16.mxu0 0
        %968 = vmatpush1.bf16.msra.mxu0 0
        %969 = vmatprep.subr.bf16.mxu0 0
        %970 = vmatpush1.bf16.msra.mxu0 0
        %971 = vmatprep.subr.bf16.mxu0 0
        %972 = vmatpush1.bf16.msra.mxu0 0
        %973 = vmatprep.mubr.bf16.mxu0 0
        %974 = vmatmul.mubr.bf16.gmra.mrb[0].mxu0 %v869
        %v975 = vpop.f32.mrb[0].mxu0
        %v976 = vadd.f32 %v891, %v975
        %v977 = vpop.f32.mrb[0].mxu0
        %v978 = vpop.f32.mrb[0].mxu0
        %v979 = vpop.f32.mrb[0].mxu0
        %980 = vdwg.mxu0
        %vm981 = vcmask 15360
        %982 = vst.msk [vmem:[%s440] sm:$0xff] %vm981, %v976
        %p983 = scmp.lt.s32.totalorder %s25, 1
        %s984 = scalar_select %p983, %s25, 1
        %s985 = smul.addr %s984, 8
        %s986 = scalar_lea.vmem %s11, %s985
        // Predicated region
        $region81: #{_forward_padded.1} parent=63 // pred_check
          %p987 = pneg %p279
        $region82: #{_forward_padded.1} parent=63 // pred_check_branch
          %989 = sbr.rel (%p987) target = $region84
        $region83: #{_forward_padded.1} parent=63 // pred_region
          _
        $region84: #{_forward_padded.1} parent=63 // pred_fallthru
          _
      $region64: #{_forward_padded.1} parent=5 // pred_fallthru
        _
      %p990 = scmp.le.s32.totalorder 2, %s20
      // Predicated region
      $region85: #{_forward_padded.1} parent=5 // pred_check
        %p991 = pneg %p990
      $region86: #{_forward_padded.1} parent=5 // pred_check_branch
        %993 = sbr.rel (%p991) target = $region88
      $region87: #{_forward_padded.1} parent=5 // pred_region
        %s994 = ssub.s32 %s20, 2
        // Predicated region
        $region89: #{_forward_padded.1} parent=87 // pred_check
          %p995 = pneg %p285
        $region90: #{_forward_padded.1} parent=87 // pred_check_branch
          %997 = sbr.rel (%p995) target = $region92
        $region91: #{_forward_padded.1} parent=87 // pred_region
          %p998 = scmp.lt.s32.totalorder %s26, 1
          %s999 = scalar_select %p998, %s26, 1
          %s1000 = smul.addr %s999, 8
          %s1001 = scalar_lea.vmem %s11, %s1000
        $region92: #{_forward_padded.1} parent=87 // pred_fallthru
          _
      $region88: #{_forward_padded.1} parent=5 // pred_fallthru
        _
    $region6: #{_forward_padded.1} parent=1 // loop_footer
      %s24 = sadd.s32 1, %s20
    $region7: #{_forward_padded.1} parent=1 // loop_footer_branch
      %19 = sbr.rel target = $region3
    $region8: #{_forward_padded.1} parent=1 // loop_exit
      _
    %1002 = vsyncpa [#allocation3], 1
    %s1003 = scalar_lea.sflag [#allocation3], 1
    %1004 = vsyncpa %s1003, 1
    %1005 = vsyncpa [#allocation5], 1
    %1006 = vsyncpa [#allocation8], 1

</llo_original>
